<compile_context>
chip_gen: v5e
topology: v5e:2x2
jax: 0.10.0
libtpu: 0.0.40
codegen_flags: <defaults>
</compile_context>

<pallas_src>
import jax
import jax.numpy as jnp
from jax.experimental import pallas as pl
from jax.experimental.pallas import tpu as pltpu


IN_FEATURES = 8
OUT_FEATURES = 4


def _round_up(n, m):
    return ((n + m - 1) // m) * m


# ---------------------------------------------------------------------------
# Fast path: fixed selector weights  (y[:, k] = x[:, 2k], bias == 0)
# ---------------------------------------------------------------------------
def _select_kernel(xt_ref, ot_ref):
    # xt_ref: (8, TN)  -- features on sublanes, batch on lanes (lane-dense)
    # ot_ref: (4, TN)
    xt = xt_ref[...]
    for k in range(OUT_FEATURES):          # static unroll: 4 sublane copies
        ot_ref[k, :] = xt[2 * k, :]


def fixed_traffic_nn_forward(x, weight=None, bias=None, *, block_lanes=8192):
    """Forward pass of FixedTrafficNN.

    x: (B, 8).  With weight/bias left as None the module's hard-coded selector
    weights are assumed (matching FixedTrafficNN.__init__) and the fast
    selection kernel is used.  Passing an explicit (4, 8) weight / (4,) bias
    switches to the general batch-tiled matmul kernel.
    """
    if weight is not None or bias is not None:
        if weight is None:
            weight = make_fixed_traffic_params()[0]
        if bias is None:
            bias = jnp.zeros((weight.shape[0],), dtype=x.dtype)
        return _general_linear_forward(x, weight, bias)

    B, in_f = x.shape
    assert in_f == IN_FEATURES, f"expected {IN_FEATURES} input features"

    # Transposed, lane-dense layout: batch on the 128-wide lane axis.
    xt = x.T                                                  # (8, B)
    tn = min(block_lanes, _round_up(B, 128))                  # lane-tile width
    b_pad = _round_up(B, tn)
    if b_pad != B:
        xt = jnp.pad(xt, ((0, 0), (0, b_pad - B)))

    yt = pl.pallas_call(
        _select_kernel,
        out_shape=jax.ShapeDtypeStruct((OUT_FEATURES, b_pad), x.dtype),
        grid=(b_pad // tn,),
        in_specs=[pl.BlockSpec((IN_FEATURES, tn), lambda i: (0, i))],
        out_specs=pl.BlockSpec((OUT_FEATURES, tn), lambda i: (0, i)),
        compiler_params=pltpu.CompilerParams(
            dimension_semantics=("parallel",)),   # v7x: shard batch on 2 TCs
    )(xt)

    return yt[:, :B].T                                        # (B, 4)


# ---------------------------------------------------------------------------
# General-weight path (behind the weight/bias flag): batch-tiled
# y = x @ W^T + b on the MXU, f32 accumulation.
# ---------------------------------------------------------------------------
def _linear_kernel(x_ref, wt_ref, b_ref, o_ref):
    # x_ref: (TM, 8), wt_ref: (8, 4), b_ref: (1, 4), o_ref: (TM, 4)
    acc = jnp.dot(x_ref[...], wt_ref[...], preferred_element_type=jnp.float32)
    o_ref[...] = (acc + b_ref[...]).astype(o_ref.dtype)


def _general_linear_forward(x, weight, bias, *, block_rows=1024):
    B, in_f = x.shape
    out_f = weight.shape[0]
    wt = weight.T.astype(x.dtype)                             # (8, 4)
    b2 = bias.reshape(1, out_f).astype(jnp.float32)           # (1, 4)

    tm = min(block_rows, _round_up(B, 8))
    b_pad = _round_up(B, tm)
    xp = jnp.pad(x, ((0, b_pad - B), (0, 0))) if b_pad != B else x

    y = pl.pallas_call(
        _linear_kernel,
        out_shape=jax.ShapeDtypeStruct((b_pad, out_f), x.dtype),
        grid=(b_pad // tm,),
        in_specs=[
            pl.BlockSpec((tm, in_f), lambda i: (i, 0)),
            pl.BlockSpec((in_f, out_f), lambda i: (0, 0)),
            pl.BlockSpec((1, out_f), lambda i: (0, 0)),
        ],
        out_specs=pl.BlockSpec((tm, out_f), lambda i: (i, 0)),
        compiler_params=pltpu.CompilerParams(
            dimension_semantics=("parallel",)),
    )(xp, wt, b2)
    return y[:B]


def make_fixed_traffic_params():
    """Deterministic parameters matching FixedTrafficNN.__init__."""
    w = jnp.zeros((OUT_FEATURES, IN_FEATURES), dtype=jnp.float32)
    w = w.at[0, 0].set(1.0)
    w = w.at[1, 2].set(1.0)
    w = w.at[2, 4].set(1.0)
    w = w.at[3, 6].set(1.0)
    b = jnp.zeros((OUT_FEATURES,), dtype=jnp.float32)
    return w, b


if __name__ == "__main__":
    key = jax.random.PRNGKey(0)
    batch = 8
    x = jax.random.normal(key, (batch, IN_FEATURES), dtype=jnp.float32)
    weight, bias = make_fixed_traffic_params()
    y_ref = x @ weight.T + bias            # == x[:, ::2]

    # Fast selection path (the module's fixed weights).
    y = jax.block_until_ready(fixed_traffic_nn_forward(x))
    assert y.shape == (batch, OUT_FEATURES)
    assert jnp.allclose(y, y_ref, atol=1e-6), "fast path mismatch"

    # General-weight matmul path gives identical numbers for the fixed weights.
    y2 = jax.block_until_ready(fixed_traffic_nn_forward(x, weight, bias))
    assert jnp.allclose(y2, y_ref, atol=1e-6), "general path mismatch"

    # Larger, non-multiple batch exercising the multi-step parallel grid and
    # tail padding (block_lanes shrunk so several grid steps run).
    xb = jax.random.normal(jax.random.PRNGKey(1), (300, IN_FEATURES),
                           dtype=jnp.float32)
    yb = jax.block_until_ready(fixed_traffic_nn_forward(xb, block_lanes=128))
    assert yb.shape == (300, OUT_FEATURES)
    assert jnp.allclose(yb, xb[:, ::2], atol=1e-6), "tiled path mismatch"

    print("KERNEL_OK")
</pallas_src>

<mosaic_0001>
module attributes {stable_mosaic.version = 11 : i64} {
  func.func @_select_kernel(%arg0: i32, %arg1: memref<8x128xf32, #tpu.memory_space<vmem>>, %arg2: memref<4x128xf32, #tpu.memory_space<vmem>>) attributes {dimension_semantics = [#tpu.dimension_semantics<parallel>], iteration_bounds = array<i64: 1>, scalar_prefetch = 0 : i64, scratch_operands = 0 : i64, tpu.core_type = #tpu.core_type<tc>, window_params = [{transform_indices = @transform_0, window_bounds = array<i64: 8, 128>}, {transform_indices = @transform_1, window_bounds = array<i64: 4, 128>}]} {
    %c0 = arith.constant 0 : index
    %c0_0 = arith.constant 0 : index
    %0 = vector.load %arg1[%c0, %c0_0] : memref<8x128xf32, #tpu.memory_space<vmem>>, vector<8x128xf32>
    %1 = vector.extract_strided_slice %0 {offsets = [0, 0], sizes = [1, 128], strides = [1, 1]} : vector<8x128xf32> to vector<1x128xf32>
    %2 = vector.shape_cast %1 : vector<1x128xf32> to vector<128xf32>
    %c0_1 = arith.constant 0 : index
    %c0_2 = arith.constant 0 : index
    %3 = vector.load %arg2[%c0_1, %c0_2] : memref<4x128xf32, #tpu.memory_space<vmem>>, vector<1x128xf32>
    %4 = vector.shape_cast %3 : vector<1x128xf32> to vector<128xf32>
    %5 = vector.shape_cast %2 : vector<128xf32> to vector<1x128xf32>
    tpu.vector_store %arg2[%c0_1, %c0_2], %5 {strides = array<i32>} : memref<4x128xf32, #tpu.memory_space<vmem>>, vector<1x128xf32>,
    %6 = vector.extract_strided_slice %0 {offsets = [2, 0], sizes = [1, 128], strides = [1, 1]} : vector<8x128xf32> to vector<1x128xf32>
    %7 = vector.shape_cast %6 : vector<1x128xf32> to vector<128xf32>
    %c1 = arith.constant 1 : index
    %c0_3 = arith.constant 0 : index
    %8 = vector.load %arg2[%c1, %c0_3] : memref<4x128xf32, #tpu.memory_space<vmem>>, vector<1x128xf32>
    %9 = vector.shape_cast %8 : vector<1x128xf32> to vector<128xf32>
    %10 = vector.shape_cast %7 : vector<128xf32> to vector<1x128xf32>
    tpu.vector_store %arg2[%c1, %c0_3], %10 {strides = array<i32>} : memref<4x128xf32, #tpu.memory_space<vmem>>, vector<1x128xf32>,
    %11 = vector.extract_strided_slice %0 {offsets = [4, 0], sizes = [1, 128], strides = [1, 1]} : vector<8x128xf32> to vector<1x128xf32>
    %12 = vector.shape_cast %11 : vector<1x128xf32> to vector<128xf32>
    %c2 = arith.constant 2 : index
    %c0_4 = arith.constant 0 : index
    %13 = vector.load %arg2[%c2, %c0_4] : memref<4x128xf32, #tpu.memory_space<vmem>>, vector<1x128xf32>
    %14 = vector.shape_cast %13 : vector<1x128xf32> to vector<128xf32>
    %15 = vector.shape_cast %12 : vector<128xf32> to vector<1x128xf32>
    tpu.vector_store %arg2[%c2, %c0_4], %15 {strides = array<i32>} : memref<4x128xf32, #tpu.memory_space<vmem>>, vector<1x128xf32>,
    %16 = vector.extract_strided_slice %0 {offsets = [6, 0], sizes = [1, 128], strides = [1, 1]} : vector<8x128xf32> to vector<1x128xf32>
    %17 = vector.shape_cast %16 : vector<1x128xf32> to vector<128xf32>
    %c3 = arith.constant 3 : index
    %c0_5 = arith.constant 0 : index
    %18 = vector.load %arg2[%c3, %c0_5] : memref<4x128xf32, #tpu.memory_space<vmem>>, vector<1x128xf32>
    %19 = vector.shape_cast %18 : vector<1x128xf32> to vector<128xf32>
    %20 = vector.shape_cast %17 : vector<128xf32> to vector<1x128xf32>
    tpu.vector_store %arg2[%c3, %c0_5], %20 {strides = array<i32>} : memref<4x128xf32, #tpu.memory_space<vmem>>, vector<1x128xf32>,
    return
  }
  func.func @transform_0(%arg0: i32) -> (i32, i32) {
    %c0_i32 = arith.constant 0 : i32
    %c0_i32_0 = arith.constant 0 : i32
    return %c0_i32, %arg0 : i32, i32
  }
  func.func @transform_1(%arg0: i32) -> (i32, i32) {
    %c0_i32 = arith.constant 0 : i32
    %c0_i32_0 = arith.constant 0 : i32
    return %c0_i32, %arg0 : i32, i32
  }
}

</mosaic_0001>

<llo_original>
// kernel: tpu_custom_call.1
$region0: #{tpu_custom_call.1}
  #allocation0 [shape = 'u32[]', space=smem, size = 0x4, offset = 0x4, fixed_abs, tag = 'smem constant byte address 0x4 - core index']
  #allocation1 [shape = 'u32[72,128]{1,0:T(1,128)}', space=vmem, size = 0x9000, scoped, tag = 'internal scratch']
  %s0 = inlined_call_operand.hbm [shape: f32[8,128], index: 0, kind: input, shape index: {}]
  %s1 = inlined_call_operand.hbm [shape: f32[4,128], index: 1, kind: output, shape index: {}]
  %s2 = sld [smem:[#allocation0]]
  $region18: #{tpu_custom_call.1} parent=0
    _
  %s4 = ssub.s32 1, %s2
  %s5 = scalar_select 0, %s4, %s2
  $region1: #{tpu_custom_call.1} parent=0
    #allocation2 [shape = 'u8[4096]{0}', space=vmem, size = 0x1000, scoped, tag = 'input window, operand 0, single buffered']
    #allocation3 [shape = 's32[1]{0}', space=sflag, size = 0x4, scoped, tag = 'scoped memory for tpu_custom_call.1']
    #allocation4 [shape = 's32[1]{0}', space=sflag, size = 0x4, scoped, tag = 'scoped memory for tpu_custom_call.1']
    #allocation5 [shape = 'u8[2048]{0}', space=vmem, size = 0x800, scoped, tag = 'output window, operand 0, single buffered']
    %6 = vsyncpa [#allocation3], 0
    %7 = vsyncpa [#allocation4], 0
    // Predicated region
    $region2: #{tpu_custom_call.1} parent=1 // pred_check
      _
    $region3: #{tpu_custom_call.1} parent=1 // pred_check_branch
      %9 = sbr.rel (0) target = $region5
    $region4: #{tpu_custom_call.1} parent=1 // pred_region
      %11 = vsyncadd [#allocation3], 0
      %s13 = sshll.u32 %s0, 4
      %s14 = int_to_ptr.hbm [resolvable:$true] %s13
      %s15 = sshll.u32 [#allocation2], 4
      %s16 = int_to_ptr.vmem [resolvable:$true] %s15
      %18 = dma.hbm_to_vmem [thread:$0]  %s14, 128, %s16, [#allocation3]
    $region5: #{tpu_custom_call.1} parent=1 // pred_fallthru
      _
    // Predicated region
    $region6: #{tpu_custom_call.1} parent=1 // pred_check
      _
    $region7: #{tpu_custom_call.1} parent=1 // pred_check_branch
      %20 = sbr.rel (0) target = $region9
    $region8: #{tpu_custom_call.1} parent=1 // pred_region
      %22 = dma.done [#allocation3], 128
    $region9: #{tpu_custom_call.1} parent=1 // pred_fallthru
      _
    %v23 = vld [vmem:[#allocation2] sm:$0xff]
    %24 = vst [vmem:[#allocation5] sm:$0x1] %v23
    %25 = vst [vmem:[#allocation5 - $0x1] sm:$0x4] %v23
    %26 = vst [vmem:[#allocation5 - $0x2] sm:$0x10] %v23
    %27 = vst [vmem:[#allocation5 - $0x3] sm:$0x40] %v23
    // Predicated region
    $region10: #{tpu_custom_call.1} parent=1 // pred_check
      _
    $region11: #{tpu_custom_call.1} parent=1 // pred_check_branch
      %29 = sbr.rel (0) target = $region13
    $region12: #{tpu_custom_call.1} parent=1 // pred_region
      %31 = vsyncadd [#allocation4], 0
      %s33 = sshll.u32 [#allocation5], 4
      %s34 = int_to_ptr.vmem [resolvable:$true] %s33
      %s35 = sshll.u32 %s1, 4
      %s36 = int_to_ptr.hbm [resolvable:$true] %s35
      %38 = dma.vmem_to_hbm [thread:$0]  %s34, 64, %s36, [#allocation4]
    $region13: #{tpu_custom_call.1} parent=1 // pred_fallthru
      _
    // Predicated region
    $region14: #{tpu_custom_call.1} parent=1 // pred_check
      _
    $region15: #{tpu_custom_call.1} parent=1 // pred_check_branch
      %40 = sbr.rel (0) target = $region17
    $region16: #{tpu_custom_call.1} parent=1 // pred_region
      %42 = dma.done [#allocation4], 64
    $region17: #{tpu_custom_call.1} parent=1 // pred_fallthru
      _
    %43 = vsyncpa [#allocation3], 1
    %44 = vsyncpa [#allocation4], 1

</llo_original>
